<compile_context>
chip_gen: v7x
topology: tpu7x:2x2x1
jax: 0.10.0
libtpu: 0.0.40
codegen_flags: <defaults>
</compile_context>

<pallas_src>
import functools

import jax
import jax.numpy as jnp
from jax.experimental import pallas as pl
from jax.experimental.pallas import tpu as pltpu

LANE = 128


# --------------------------- hardware-aware budgets ---------------------------
def _vmem_capacity_bytes():
    try:
        return int(pltpu.get_tpu_info().vmem_capacity_bytes)
    except Exception:
        return 64 << 20            # conservative: fits every generation


def _default_vmem_limit():
    cap = _vmem_capacity_bytes()
    # Leave headroom for Mosaic-internal scratch: ~100 MiB on 128-MiB
    # v5e/v6e parts, ~48 MiB on 64-MiB (per-TC) v7x parts.
    return int(max(16 << 20, min(cap - (16 << 20), 100 << 20)))


def _has_two_tensorcores():
    # v7x packs two TensorCores per chip; only then do we deliberately split
    # the N axis / force >=2 parallel grid steps.
    try:
        kind = jax.devices()[0].device_kind.lower()
    except Exception:
        return False
    return "v7" in kind


def _cparams(sem, vmem_limit):
    return pltpu.CompilerParams(dimension_semantics=sem,
                                vmem_limit_bytes=int(vmem_limit))


# ------------------------------ tiling helpers ------------------------------
def _pick_tile(dim, target, align):
    """Largest multiple of `align` that divides `dim` and is <= target,
    otherwise the full dim (full-extent blocks are always legal)."""
    if dim <= target or dim <= align:
        return dim
    t = (min(target, dim) // align) * align
    while t >= align:
        if dim % t == 0:
            return t
        t -= align
    return dim


def _pick_n_tile(N, prefer_split=False):
    # Lane-dense (multiple of 128) N tile.  prefer_split keeps >=2 tiles on
    # the N grid axis so both v7x TensorCores get work when N is the only
    # parallel axis; single-TC chips keep the full-width tile (full MXU lane
    # occupancy, no re-read of bias/gamma/beta).
    if prefer_split and N >= 2 * LANE:
        return _pick_tile(N, max(LANE, min(512, N // 2)), LANE)
    return _pick_tile(N, 512, LANE)


def _linear_tiles(M, K, N, in_cb, out_cb, budget, two_cores):
    """Pick (tm, tk, tn) for the K-tiled linear kernel under a VMEM budget."""
    sub = 16 if in_cb == 2 else 8
    tn = _pick_tile(N, 512, LANE)
    # M tile targets ~8 MiB of x per buffer (amortizes ~0.35us/step overhead
    # and cuts the number of W^T re-streams from HBM).
    tm_target = max(sub, min(2048, ((8 << 20) // max(1, K * in_cb)) // sub * sub))
    tm = _pick_tile(M, tm_target, sub)
    tk = K

    def footprint(tm_, tk_, tn_):
        return (2 * (tm_ * tk_ + tk_ * tn_) * in_cb   # x / W^T (double-buffered)
                + 2 * tn_ * 4                          # bias
                + 2 * tm_ * tn_ * out_cb               # output (double-buffered)
                + tm_ * tn_ * 4)                       # f32 accumulator scratch

    # Shrink the K tile first (keeps MXU-friendly tm/tn), then tm, then tn.
    while footprint(tm, tk, tn) > budget and tk > LANE:
        nk = _pick_tile(K, max(LANE, tk // 2), LANE)
        if nk >= tk:
            break
        tk = nk
    while footprint(tm, tk, tn) > budget and tm > sub:
        nm = _pick_tile(M, max(sub, tm // 2), sub)
        if nm >= tm:
            break
        tm = nm
    while footprint(tm, tk, tn) > budget and tn > LANE:
        nn_ = _pick_tile(N, max(LANE, tn // 2), LANE)
        if nn_ >= tn:
            break
        tn = nn_

    # v7x: guarantee >=2 parallel grid steps so the second TensorCore works.
    if two_cores and (M // tm) * (N // tn) < 2:
        nm = _pick_tile(M, max(sub, tm // 2), sub)
        if M // max(1, nm) >= 2:
            tm = nm
        else:
            nn_ = _pick_tile(N, max(LANE, tn // 2), LANE)
            if N // max(1, nn_) >= 2:
                tn = nn_
    return tm, tk, tn


# ------------------------------- Linear kernel ------------------------------
def _linear_kernel(x_ref, w_ref, b_ref, o_ref, acc_ref, *, add_bias):
    # y = x @ W^T (+ b); K grid axis with f32 accumulator scratch.
    k = pl.program_id(2)

    @pl.when(k == 0)
    def _():
        acc_ref[...] = jnp.zeros_like(acc_ref)

    acc_ref[...] += jnp.dot(x_ref[...], w_ref[...],
                            preferred_element_type=jnp.float32)

    @pl.when(k == pl.num_programs(2) - 1)
    def _():
        y = acc_ref[...]
        if add_bias:
            y = y + b_ref[...].astype(jnp.float32)
        o_ref[...] = y.astype(o_ref.dtype)


def linear_pallas(x, w_t, b, *, out_dtype=None, add_bias=True,
                  vmem_limit=None, two_cores=False):
    M, K = x.shape
    K2, N = w_t.shape
    assert K == K2
    out_dtype = out_dtype or x.dtype
    vmem_limit = vmem_limit or _default_vmem_limit()
    in_cb = jnp.dtype(x.dtype).itemsize
    out_cb = jnp.dtype(out_dtype).itemsize
    tm, tk, tn = _linear_tiles(M, K, N, in_cb, out_cb,
                               budget=vmem_limit - (4 << 20),
                               two_cores=two_cores)
    return pl.pallas_call(
        functools.partial(_linear_kernel, add_bias=add_bias),
        out_shape=jax.ShapeDtypeStruct((M, N), out_dtype),
        grid=(M // tm, N // tn, K // tk),
        in_specs=[
            pl.BlockSpec((tm, tk), lambda i, j, k: (i, k)),   # x tile
            pl.BlockSpec((tk, tn), lambda i, j, k: (k, j)),   # W^T tile
            pl.BlockSpec((1, tn), lambda i, j, k: (0, j)),    # bias
        ],
        out_specs=pl.BlockSpec((tm, tn), lambda i, j, k: (i, j)),
        scratch_shapes=[pltpu.VMEM((tm, tn), jnp.float32)],
        compiler_params=_cparams(("parallel", "parallel", "arbitrary"),
                                 vmem_limit),
    )(x, w_t, b)


# ------------------------- fused Linear + BatchNorm --------------------------
def _linear_bn_kernel(x_ref, w_ref, b_ref, g_ref, beta_ref, o_ref, *, eps):
    # Full batch in one M block: matmul, then training-mode BN over axis 0
    # on the f32 accumulator before it ever leaves VMEM.
    acc = jnp.dot(x_ref[...], w_ref[...], preferred_element_type=jnp.float32)
    y = acc + b_ref[...].astype(jnp.float32)
    inv_n = 1.0 / y.shape[0]                          # single 1/n multiply
    mean = jnp.sum(y, axis=0, keepdims=True) * inv_n
    centered = y - mean
    var = jnp.sum(centered * centered, axis=0, keepdims=True) * inv_n
    inv = jax.lax.rsqrt(var + eps)                    # EUP slot
    o_ref[...] = (centered * (inv * g_ref[...].astype(jnp.float32))
                  + beta_ref[...].astype(jnp.float32)).astype(o_ref.dtype)


def linear_bn_pallas(x, w_t, b, gamma, beta, *, eps=1e-5, out_dtype=None,
                     vmem_limit=None, two_cores=False):
    M, K = x.shape
    _, N = w_t.shape
    out_dtype = out_dtype or x.dtype
    vmem_limit = vmem_limit or _default_vmem_limit()
    tn = _pick_n_tile(N, prefer_split=two_cores)
    # TODO(synk): on v7x, if reading x dominates (K >> N), split M across the
    # two TensorCores with a cross-core partial-stats reduction instead of N.
    return pl.pallas_call(
        functools.partial(_linear_bn_kernel, eps=eps),
        out_shape=jax.ShapeDtypeStruct((M, N), out_dtype),
        grid=(N // tn,),
        in_specs=[
            # Same full-batch block at every grid step -> single buffer.
            pl.BlockSpec((M, K), lambda j: (0, 0),
                         pipeline_mode=pl.Buffered(1)),
            pl.BlockSpec((K, tn), lambda j: (0, j)),  # W^T column tile
            pl.BlockSpec((1, tn), lambda j: (0, j)),  # bias
            pl.BlockSpec((1, tn), lambda j: (0, j)),  # gamma
            pl.BlockSpec((1, tn), lambda j: (0, j)),  # beta
        ],
        out_specs=pl.BlockSpec((M, tn), lambda j: (0, j)),
        compiler_params=_cparams(("parallel",), vmem_limit),
    )(x, w_t, b, gamma, beta)


# ------------------ M-tiled BN fallback: column stats kernel -----------------
def _bn_stats_kernel(y_ref, sum_ref, sumsq_ref, s_ref, ss_ref):
    i = pl.program_id(1)                              # M (reduction) axis

    @pl.when(i == 0)
    def _():
        s_ref[...] = jnp.zeros_like(s_ref)
        ss_ref[...] = jnp.zeros_like(ss_ref)

    y = y_ref[...].astype(jnp.float32)
    s_ref[...] += jnp.sum(y, axis=0, keepdims=True)
    ss_ref[...] += jnp.sum(y * y, axis=0, keepdims=True)

    @pl.when(i == pl.num_programs(1) - 1)
    def _():
        sum_ref[...] = s_ref[...]
        sumsq_ref[...] = ss_ref[...]


def bn_stats_pallas(y, *, vmem_limit=None, two_cores=False):
    M, N = y.shape
    vmem_limit = vmem_limit or _default_vmem_limit()
    y_cb = jnp.dtype(y.dtype).itemsize
    sub = 16 if y_cb == 2 else 8
    tn = _pick_n_tile(N, prefer_split=two_cores)
    tm_target = max(sub, min(4096, ((8 << 20) // max(1, tn * y_cb)) // sub * sub))
    tm = _pick_tile(M, tm_target, sub)
    return pl.pallas_call(
        _bn_stats_kernel,
        out_shape=(jax.ShapeDtypeStruct((1, N), jnp.float32),
                   jax.ShapeDtypeStruct((1, N), jnp.float32)),
        grid=(N // tn, M // tm),                       # M innermost (resident acc)
        in_specs=[pl.BlockSpec((tm, tn), lambda j, i: (i, j))],
        out_specs=(pl.BlockSpec((1, tn), lambda j, i: (0, j)),
                   pl.BlockSpec((1, tn), lambda j, i: (0, j))),
        scratch_shapes=[pltpu.VMEM((1, tn), jnp.float32),
                        pltpu.VMEM((1, tn), jnp.float32)],
        compiler_params=_cparams(("parallel", "arbitrary"), vmem_limit),
    )(y)


# ------------------ M-tiled BN fallback: normalize (y*scale+shift) -----------
def _scale_shift_kernel(y_ref, sc_ref, sh_ref, o_ref):
    o_ref[...] = (y_ref[...].astype(jnp.float32) * sc_ref[...]
                  + sh_ref[...]).astype(o_ref.dtype)


def scale_shift_pallas(y, scale, shift, *, out_dtype=None, vmem_limit=None):
    M, N = y.shape
    out_dtype = out_dtype or y.dtype
    vmem_limit = vmem_limit or _default_vmem_limit()
    y_cb = jnp.dtype(y.dtype).itemsize
    out_cb = jnp.dtype(out_dtype).itemsize
    sub = 16 if y_cb == 2 else 8
    tn = _pick_tile(N, 512, LANE)
    per_row = tn * (y_cb + out_cb)
    tm_target = max(sub, min(4096, ((6 << 20) // max(1, per_row)) // sub * sub))
    tm = _pick_tile(M, tm_target, sub)
    return pl.pallas_call(
        _scale_shift_kernel,
        out_shape=jax.ShapeDtypeStruct((M, N), out_dtype),
        grid=(M // tm, N // tn),
        in_specs=[
            pl.BlockSpec((tm, tn), lambda i, j: (i, j)),
            pl.BlockSpec((1, tn), lambda i, j: (0, j)),
            pl.BlockSpec((1, tn), lambda i, j: (0, j)),
        ],
        out_specs=pl.BlockSpec((tm, tn), lambda i, j: (i, j)),
        compiler_params=_cparams(("parallel", "parallel"), vmem_limit),
    )(y, scale, shift)


# ------------------------------ Module wrapper -------------------------------
class FeatBottleneckPallas:
    """JAX/Pallas equivalent of feat_bottleneck (forward pass)."""

    def __init__(self, feature_dim, bottleneck_dim=256, type='ori',
                 key=None, compute_dtype=jnp.bfloat16, out_dtype=None,
                 eps=1e-5, force_bn_fallback=False):
        if key is None:
            key = jax.random.PRNGKey(0)
        k_w, _ = jax.random.split(key)
        # Linear: xavier_normal_(weight), zeros_(bias).
        std = (2.0 / (feature_dim + bottleneck_dim)) ** 0.5
        w = std * jax.random.normal(k_w, (bottleneck_dim, feature_dim),
                                    dtype=jnp.float32)
        self.compute_dtype = compute_dtype
        self.out_dtype = out_dtype            # None -> match input dtype
        self.eps = eps
        # Store W^T once in the MXU compute dtype (no per-call cast traffic).
        self.w_t = jnp.asarray(w.T).astype(compute_dtype)     # [K, N]
        self.b = jnp.zeros((1, bottleneck_dim), dtype=jnp.float32)
        # BatchNorm1d affine defaults (init_weights is only applied to the
        # Linear): weight=1, bias=0.  Training-mode batch statistics only;
        # running_mean/var are not tracked (matches nn.BatchNorm1d.train()).
        self.gamma = jnp.ones((1, bottleneck_dim), dtype=jnp.float32)
        self.beta = jnp.zeros((1, bottleneck_dim), dtype=jnp.float32)
        self.type = type
        self._force_fallback = bool(force_bn_fallback)
        # Generation-aware budgets, queried once.
        self._vmem_limit = _default_vmem_limit()
        self._two_cores = _has_two_tensorcores()
        # NOTE: dropout/relu are defined in the PyTorch module but never used
        # in forward(), so they are intentionally omitted here.

    # ----------------------------------------------------------------- helpers
    def _fused_bn_fits(self, M, K, N, in_cb, out_cb):
        tn = _pick_n_tile(N, prefer_split=self._two_cores)
        est = (M * K * in_cb            # full-batch x (single-buffered)
               + 2 * K * tn * in_cb     # W^T column tile
               + 2 * 3 * tn * 4         # bias / gamma / beta
               + 2 * M * tn * out_cb    # output tile
               + 3 * M * tn * 4)        # f32 matmul acc + BN temporaries
        return est <= self._vmem_limit - (4 << 20)

    def _linear(self, xc, out_dtype, add_bias=True):
        M = xc.shape[0]
        sub = 16 if jnp.dtype(self.compute_dtype).itemsize == 2 else 8
        m_pad = (-M) % sub
        xp = jnp.pad(xc, ((0, m_pad), (0, 0))) if m_pad else xc
        y = linear_pallas(xp, self.w_t, self.b, out_dtype=out_dtype,
                          add_bias=add_bias, vmem_limit=self._vmem_limit,
                          two_cores=self._two_cores)
        return y[:M] if m_pad else y

    # ----------------------------------------------------------------- forward
    def __call__(self, x):
        out_dtype = self.out_dtype or x.dtype
        xc = x.astype(self.compute_dtype)
        M, K = xc.shape
        N = self.w_t.shape[1]

        if self.type != 'bn':
            return self._linear(xc, out_dtype)

        in_cb = jnp.dtype(self.compute_dtype).itemsize
        out_cb = jnp.dtype(out_dtype).itemsize
        if (not self._force_fallback
                and self._fused_bn_fits(M, K, N, in_cb, out_cb)):
            # Fused path: BN folded into the matmul epilogue, no y HBM trip.
            return linear_bn_pallas(xc, self.w_t, self.b, self.gamma,
                                    self.beta, eps=self.eps,
                                    out_dtype=out_dtype,
                                    vmem_limit=self._vmem_limit,
                                    two_cores=self._two_cores)

        # M-tiled fallback (large batches): linear -> column stats -> normalize.
        # Under batch-statistics BN the Linear bias shifts every row of a
        # column equally and cancels exactly, so it is omitted here; the
        # zero-padded rows then stay exactly zero and contribute nothing to
        # the column sums (we divide by the true M).
        y_dtype = self.compute_dtype
        sub = 16 if jnp.dtype(y_dtype).itemsize == 2 else 8
        m_pad = (-M) % sub
        xp = jnp.pad(xc, ((0, m_pad), (0, 0))) if m_pad else xc
        y = linear_pallas(xp, self.w_t, self.b, out_dtype=y_dtype,
                          add_bias=False, vmem_limit=self._vmem_limit,
                          two_cores=self._two_cores)
        col_sum, col_sumsq = bn_stats_pallas(y, vmem_limit=self._vmem_limit,
                                             two_cores=self._two_cores)
        inv_n = 1.0 / M
        mean = col_sum * inv_n
        var = jnp.maximum(col_sumsq * inv_n - mean * mean, 0.0)
        scale = self.gamma * jax.lax.rsqrt(var + self.eps)
        shift = self.beta - mean * scale
        out = scale_shift_pallas(y, scale, shift, out_dtype=out_dtype,
                                 vmem_limit=self._vmem_limit)
        return out[:M] if m_pad else out


# -------------------------------- Reference ----------------------------------
def _ref_forward(mod, x):
    # Same bf16 operands / f32 accumulation as the kernels.
    xc = x.astype(mod.compute_dtype)
    y = jnp.dot(xc, mod.w_t, preferred_element_type=jnp.float32) + mod.b
    if mod.type == 'bn':
        mean = y.mean(axis=0, keepdims=True)
        var = ((y - mean) ** 2).mean(axis=0, keepdims=True)
        y = (y - mean) * jax.lax.rsqrt(var + mod.eps) * mod.gamma + mod.beta
    return y.astype(x.dtype)


if __name__ == "__main__":
    key = jax.random.PRNGKey(0)
    kx, kp = jax.random.split(key)

    batch, feature_dim, bottleneck_dim = 8, 32, 256
    x = jax.random.normal(kx, (batch, feature_dim), dtype=jnp.float32)

    # type='ori' path (default): just the bottleneck Linear.
    mod_ori = FeatBottleneckPallas(feature_dim, bottleneck_dim, type='ori',
                                   key=kp)
    y_ori = mod_ori(x)
    jax.block_until_ready(y_ori)
    assert y_ori.shape == (batch, bottleneck_dim)
    assert jnp.allclose(y_ori, _ref_forward(mod_ori, x), atol=2e-2, rtol=2e-2)

    # type='bn' path: Linear fused with BatchNorm1d (batch statistics).
    mod_bn = FeatBottleneckPallas(feature_dim, bottleneck_dim, type='bn',
                                  key=kp)
    y_bn = mod_bn(x)
    jax.block_until_ready(y_bn)
    assert y_bn.shape == (batch, bottleneck_dim)
    assert jnp.allclose(y_bn, _ref_forward(mod_bn, x), atol=2e-2, rtol=2e-2)

    # type='bn', M-tiled fallback path, forced so the large-batch kernels
    # (column stats + normalize) are compile- and correctness-tested too.
    mod_fb = FeatBottleneckPallas(feature_dim, bottleneck_dim, type='bn',
                                  key=kp, force_bn_fallback=True)
    y_fb = mod_fb(x)
    jax.block_until_ready(y_fb)
    assert y_fb.shape == (batch, bottleneck_dim)
    assert jnp.allclose(y_fb, _ref_forward(mod_fb, x), atol=2e-2, rtol=2e-2)

    print("KERNEL_OK")
</pallas_src>

<mosaic_0001>
module attributes {stable_mosaic.version = 11 : i64} {
  func.func @_linear_kernel(%arg0: i32, %arg1: i32, %arg2: i32, %arg3: memref<16x32xbf16, #tpu.memory_space<vmem>>, %arg4: memref<32x256xbf16, #tpu.memory_space<vmem>>, %arg5: memref<1x256xf32, #tpu.memory_space<vmem>>, %arg6: memref<16x256xf32, #tpu.memory_space<vmem>>, %arg7: memref<16x256xf32, #tpu.memory_space<vmem>>) attributes {dimension_semantics = [#tpu.dimension_semantics<parallel>, #tpu.dimension_semantics<parallel>, #tpu.dimension_semantics<arbitrary>], iteration_bounds = array<i64: 1, 1, 1>, scalar_prefetch = 0 : i64, scratch_operands = 1 : i64, tpu.core_type = #tpu.core_type<tc>, window_params = [{transform_indices = @transform_0, window_bounds = array<i64: 16, 32>}, {transform_indices = @transform_1, window_bounds = array<i64: 32, 256>}, {transform_indices = @transform_2, window_bounds = array<i64: 1, 256>}, {transform_indices = @transform_3, window_bounds = array<i64: 16, 256>}]} {
    %c0_i32 = arith.constant 0 : i32
    %0 = arith.cmpi eq, %arg2, %c0_i32 : i32
    %1 = arith.extui %0 : i1 to i32
    %c0_i32_0 = arith.constant 0 : i32
    %2 = arith.cmpi ne, %1, %c0_i32_0 : i32
    scf.if %2 {
      %cst_10 = arith.constant 0.000000e+00 : f32
      %12 = vector.broadcast %cst_10 : f32 to vector<16x256xf32>
      %c0_11 = arith.constant 0 : index
      %c0_12 = arith.constant 0 : index
      %13 = vector.load %arg7[%c0_11, %c0_12] : memref<16x256xf32, #tpu.memory_space<vmem>>, vector<16x256xf32>
      tpu.vector_store %arg7[%c0_11, %c0_12], %12 {strides = array<i32>} : memref<16x256xf32, #tpu.memory_space<vmem>>, vector<16x256xf32>,
    } else {
    }
    %c0 = arith.constant 0 : index
    %c0_1 = arith.constant 0 : index
    %3 = vector.load %arg7[%c0, %c0_1] : memref<16x256xf32, #tpu.memory_space<vmem>>, vector<16x256xf32>
    %c0_2 = arith.constant 0 : index
    %c0_3 = arith.constant 0 : index
    %4 = vector.load %arg3[%c0_2, %c0_3] : memref<16x32xbf16, #tpu.memory_space<vmem>>, vector<16x32xbf16>
    %c0_4 = arith.constant 0 : index
    %c0_5 = arith.constant 0 : index
    %5 = vector.load %arg4[%c0_4, %c0_5] : memref<32x256xbf16, #tpu.memory_space<vmem>>, vector<32x256xbf16>
    %cst = arith.constant dense<0.000000e+00> : vector<16x256xf32>
    %6 = tpu.matmul %4, %5, %cst {dimension_numbers = #tpu.dot_dimension_numbers<[1], [0], [0], [1], [0, 0, 1, 1], [], []>} : vector<16x32xbf16>, vector<32x256xbf16>, vector<16x256xf32> -> vector<16x256xf32>
    %7 = arith.addf %3, %6 : vector<16x256xf32>
    %c0_6 = arith.constant 0 : index
    %c0_7 = arith.constant 0 : index
    %8 = vector.load %arg7[%c0_6, %c0_7] : memref<16x256xf32, #tpu.memory_space<vmem>>, vector<16x256xf32>
    tpu.vector_store %arg7[%c0_6, %c0_7], %7 {strides = array<i32>} : memref<16x256xf32, #tpu.memory_space<vmem>>, vector<16x256xf32>,
    %c0_i32_8 = arith.constant 0 : i32
    %9 = arith.cmpi eq, %arg2, %c0_i32_8 : i32
    %10 = arith.extui %9 : i1 to i32
    %c0_i32_9 = arith.constant 0 : i32
    %11 = arith.cmpi ne, %10, %c0_i32_9 : i32
    scf.if %11 {
      %c0_10 = arith.constant 0 : index
      %c0_11 = arith.constant 0 : index
      %12 = vector.load %arg7[%c0_10, %c0_11] : memref<16x256xf32, #tpu.memory_space<vmem>>, vector<16x256xf32>
      %c0_12 = arith.constant 0 : index
      %c0_13 = arith.constant 0 : index
      %13 = vector.load %arg5[%c0_12, %c0_13] : memref<1x256xf32, #tpu.memory_space<vmem>>, vector<1x256xf32>
      %14 = vector.broadcast %13 : vector<1x256xf32> to vector<16x256xf32>
      %15 = arith.addf %12, %14 : vector<16x256xf32>
      %c0_14 = arith.constant 0 : index
      %c0_15 = arith.constant 0 : index
      %16 = vector.load %arg6[%c0_14, %c0_15] : memref<16x256xf32, #tpu.memory_space<vmem>>, vector<16x256xf32>
      tpu.vector_store %arg6[%c0_14, %c0_15], %15 {strides = array<i32>} : memref<16x256xf32, #tpu.memory_space<vmem>>, vector<16x256xf32>,
    } else {
    }
    return
  }
  func.func @transform_0(%arg0: i32, %arg1: i32, %arg2: i32) -> (i32, i32) {
    %c0_i32 = arith.constant 0 : i32
    return %arg0, %arg2 : i32, i32
  }
  func.func @transform_1(%arg0: i32, %arg1: i32, %arg2: i32) -> (i32, i32) {
    %c0_i32 = arith.constant 0 : i32
    return %arg2, %arg1 : i32, i32
  }
  func.func @transform_2(%arg0: i32, %arg1: i32, %arg2: i32) -> (i32, i32) {
    %c0_i32 = arith.constant 0 : i32
    %c0_i32_0 = arith.constant 0 : i32
    return %c0_i32, %arg1 : i32, i32
  }
  func.func @transform_3(%arg0: i32, %arg1: i32, %arg2: i32) -> (i32, i32) {
    %c0_i32 = arith.constant 0 : i32
    return %arg0, %arg1 : i32, i32
  }
}

</mosaic_0001>

<llo_original>
// kernel: tpu_custom_call.1
$region0: #{tpu_custom_call.1}
  #allocation0 [shape = 'u32[]', space=smem, size = 0x4, offset = 0x4, fixed_abs, tag = 'smem constant byte address 0x4 - core index']
  #allocation1 [shape = 'u32[144,128]{1,0:T(1,128)}', space=vmem, size = 0x12000, scoped, tag = 'internal scratch']
  #allocation2 [shape = 'f32[16,256]{1,0:T(8,128)}', space=vmem, size = 0x4000, scoped, tag = 'scratch operand']
  %s0 = inlined_call_operand.hbm [shape: bf16[16,32], index: 0, kind: input, shape index: {}]
  %s1 = inlined_call_operand.hbm [shape: bf16[32,256], index: 1, kind: input, shape index: {}]
  %s2 = inlined_call_operand.vmem [shape: f32[1,256], index: 2, kind: input, shape index: {}]
  %s3 = inlined_call_operand.hbm [shape: f32[16,256], index: 3, kind: output, shape index: {}]
  %s4 = sld [smem:[#allocation0]]
  $region38: #{tpu_custom_call.1} parent=0
    _
  %s6 = ssub.s32 1, %s4
  %s7 = scalar_select 0, %s6, %s4
  $region1: #{tpu_custom_call.1} parent=0
    #allocation3 [shape = 'u8[4096]{0}', space=vmem, size = 0x1000, scoped, tag = 'input window, operand 0, single buffered']
    #allocation4 [shape = 's32[1]{0}', space=sflag, size = 0x4, scoped, tag = 'scoped memory for tpu_custom_call.1']
    #allocation5 [shape = 's32[1]{0}', space=sflag, size = 0x4, scoped, tag = 'scoped memory for tpu_custom_call.1']
    #allocation6 [shape = 'u8[16384]{0}', space=vmem, size = 0x4000, scoped, tag = 'input window, operand 1, single buffered']
    #allocation7 [shape = 's32[1]{0}', space=sflag, size = 0x4, scoped, tag = 'scoped memory for tpu_custom_call.1']
    #allocation8 [shape = 'u8[16384]{0}', space=vmem, size = 0x4000, scoped, tag = 'output window, operand 0, single buffered']
    %8 = vsyncpa [#allocation4], 0
    %9 = vsyncpa [#allocation7], 0
    %10 = vsyncpa [#allocation5], 0
    // Predicated region
    $region2: #{tpu_custom_call.1} parent=1 // pred_check
      _
    $region3: #{tpu_custom_call.1} parent=1 // pred_check_branch
      %12 = sbr.rel (0) target = $region5
    $region4: #{tpu_custom_call.1} parent=1 // pred_region
      %s14 = ssub.s32 128, 128
      %15 = vsyncadd [#allocation4], %s14
      %s16 = sshll.u32 [#allocation3], 4
      %s17 = int_to_ptr.vmem [resolvable:$true] %s16
      %22 = dma.hbm_to_vmem [thread:$0]  %s0, 128, %s17, [#allocation4], 64, 64, 4
    $region5: #{tpu_custom_call.1} parent=1 // pred_fallthru
      _
    // Predicated region
    $region6: #{tpu_custom_call.1} parent=1 // pred_check
      _
    $region7: #{tpu_custom_call.1} parent=1 // pred_check_branch
      %24 = sbr.rel (0) target = $region9
    $region8: #{tpu_custom_call.1} parent=1 // pred_region
      %s26 = ssub.s32 512, 512
      %27 = vsyncadd [#allocation7], %s26
      %s28 = sshll.u32 [#allocation6], 4
      %s29 = int_to_ptr.vmem [resolvable:$true] %s28
      %34 = dma.hbm_to_vmem [thread:$0]  %s1, 512, %s29, [#allocation7], 128, 128, 8
    $region9: #{tpu_custom_call.1} parent=1 // pred_fallthru
      _
    // Predicated region
    $region10: #{tpu_custom_call.1} parent=1 // pred_check
      _
    $region11: #{tpu_custom_call.1} parent=1 // pred_check_branch
      %36 = sbr.rel (0) target = $region13
    $region12: #{tpu_custom_call.1} parent=1 // pred_region
      _
    $region13: #{tpu_custom_call.1} parent=1 // pred_fallthru
      _
    // Predicated region
    $region14: #{tpu_custom_call.1} parent=1 // pred_check
      _
    $region15: #{tpu_custom_call.1} parent=1 // pred_check_branch
      %38 = sbr.rel (0) target = $region17
    $region16: #{tpu_custom_call.1} parent=1 // pred_region
      %39 = dma.done [#allocation4], 128
    $region17: #{tpu_custom_call.1} parent=1 // pred_fallthru
      _
    // Predicated region
    $region18: #{tpu_custom_call.1} parent=1 // pred_check
      _
    $region19: #{tpu_custom_call.1} parent=1 // pred_check_branch
      %41 = sbr.rel (0) target = $region21
    $region20: #{tpu_custom_call.1} parent=1 // pred_region
      %42 = dma.done [#allocation7], 512
    $region21: #{tpu_custom_call.1} parent=1 // pred_fallthru
      _
    %p44 = scmp.eq.s32.totalorder 0, 0
    // Predicated region
    $region22: #{tpu_custom_call.1} parent=1 // pred_check
      %p45 = pneg %p44
    $region23: #{tpu_custom_call.1} parent=1 // pred_check_branch
      %47 = sbr.rel (%p45) target = $region25
    $region24: #{tpu_custom_call.1} parent=1 // pred_region
      %48 = vst [vmem:[#allocation2] sm:$0xff] 0.0
      %49 = vst [vmem:[#allocation2 + $0x8] sm:$0xff] 0.0
      %50 = vst [vmem:[#allocation2 + $0x10] sm:$0xff] 0.0
      %51 = vst [vmem:[#allocation2 + $0x18] sm:$0xff] 0.0
    $region25: #{tpu_custom_call.1} parent=1 // pred_fallthru
      _
    %v52 = vld [vmem:[#allocation2] sm:$0xff]
    %v53 = vld [vmem:[#allocation2 + $0x8] sm:$0xff]
    %v54 = vld [vmem:[#allocation2 + $0x10] sm:$0xff]
    %v55 = vld [vmem:[#allocation2 + $0x18] sm:$0xff]
    %v56 = vld [vmem:[#allocation3] sm:$0xf]
    %v57 = vld [vmem:[#allocation3 + $0x4] sm:$0xf]
    %v58 = vld [vmem:[#allocation6] sm:$0xff]
    %v59 = vld [vmem:[#allocation6 + $0x8] sm:$0xff]
    %v60 = vld [vmem:[#allocation6 + $0x10] sm:$0xff]
    %v61 = vld [vmem:[#allocation6 + $0x18] sm:$0xff]
    %v64 = vunpack.c.l.b16 %v56
    %v65 = vunpack.c.l.b16 %v57
    %v66 = vpack.c.b16 %v65, %v64
    %v71 = vunpack.c.l.b16 %v58
    %v72 = vunpack.c.h.b16 %v58
    %v73 = vunpack.c.l.b16 %v59
    %v74 = vunpack.c.h.b16 %v59
    %v75 = vunpack.c.l.b16 %v60
    %v76 = vunpack.c.h.b16 %v60
    %v77 = vunpack.c.l.b16 %v61
    %v78 = vunpack.c.h.b16 %v61
    %v79 = vpack.c.b16 %v73, %v71
    %v80 = vpack.c.b16 %v74, %v72
    %v81 = vpack.c.b16 %v77, %v75
    %v82 = vpack.c.b16 %v78, %v76
    %vm87 = vcmask 261120
    %v89 = vsel %vm87, %v66, 0
    %91 = vmatprep.subr.bf16.mxu0 %v80
    %92 = vmatpush1.bf16.msra.mxu0 %v79
    %93 = vmatprep.subr.bf16.mxu0 %v82
    %94 = vmatpush1.bf16.msra.mxu0 %v81
    %95 = vmatprep.subr.bf16.mxu0 0
    %96 = vmatpush1.bf16.msra.mxu0 0
    %97 = vmatprep.subr.bf16.mxu0 0
    %98 = vmatpush1.bf16.msra.mxu0 0
    %99 = vmatprep.subr.bf16.mxu0 0
    %100 = vmatpush1.bf16.msra.mxu0 0
    %101 = vmatprep.subr.bf16.mxu0 0
    %102 = vmatpush1.bf16.msra.mxu0 0
    %103 = vmatprep.subr.bf16.mxu0 0
    %104 = vmatpush1.bf16.msra.mxu0 0
    %105 = vmatprep.subr.bf16.mxu0 0
    %106 = vmatpush1.bf16.msra.mxu0 0
    %107 = vmatprep.subr.bf16.mxu0 0
    %108 = vmatpush1.bf16.msra.mxu0 0
    %109 = vmatprep.subr.bf16.mxu0 0
    %110 = vmatpush1.bf16.msra.mxu0 0
    %111 = vmatprep.subr.bf16.mxu0 0
    %112 = vmatpush1.bf16.msra.mxu0 0
    %113 = vmatprep.subr.bf16.mxu0 0
    %114 = vmatpush1.bf16.msra.mxu0 0
    %115 = vmatprep.subr.bf16.mxu0 0
    %116 = vmatpush1.bf16.msra.mxu0 0
    %117 = vmatprep.subr.bf16.mxu0 0
    %118 = vmatpush1.bf16.msra.mxu0 0
    %119 = vmatprep.subr.bf16.mxu0 0
    %120 = vmatpush1.bf16.msra.mxu0 0
    %121 = vmatprep.subr.bf16.mxu0 0
    %122 = vmatpush1.bf16.msra.mxu0 0
    %123 = vmatprep.mubr.bf16.mxu0 0
    %124 = vmatmul.mubr.bf16.gmra.mrb[0].mxu0 %v89
    %v125 = vpop.f32.mrb[0].mxu0
    %v126 = vadd.f32 0.0, %v125
    %v127 = vpop.f32.mrb[0].mxu0
    %v128 = vadd.f32 0.0, %v127
    %v129 = vpop.f32.mrb[0].mxu0
    %v130 = vadd.f32 0.0, %v129
    %v131 = vpop.f32.mrb[0].mxu0
    %v132 = vadd.f32 0.0, %v131
    %133 = vdwg.mxu0
    %v134 = vadd.f32 %v52, %v126
    %v135 = vadd.f32 %v53, %v128
    %v136 = vadd.f32 %v54, %v130
    %v137 = vadd.f32 %v55, %v132
    %138 = vst [vmem:[#allocation2] sm:$0xff] %v134
    %139 = vst [vmem:[#allocation2 + $0x8] sm:$0xff] %v135
    %140 = vst [vmem:[#allocation2 + $0x10] sm:$0xff] %v136
    %141 = vst [vmem:[#allocation2 + $0x18] sm:$0xff] %v137
    // Predicated region
    $region26: #{tpu_custom_call.1} parent=1 // pred_check
      %p142 = pneg %p44
    $region27: #{tpu_custom_call.1} parent=1 // pred_check_branch
      %144 = sbr.rel (%p142) target = $region29
    $region28: #{tpu_custom_call.1} parent=1 // pred_region
      %v145 = vld [vmem:[#allocation2] sm:$0xff]
      %v146 = vld [vmem:[#allocation2 + $0x8] sm:$0xff]
      %v147 = vld [vmem:[#allocation2 + $0x10] sm:$0xff]
      %v148 = vld [vmem:[#allocation2 + $0x18] sm:$0xff]
      %v149 = vld [vmem:[%s2] sm:$0x3]
      %v151 = vlaneseq
      %v152 = vshrl.u32 %v151, 7
      %v153 = vsub.s32 0, %v152
      %v154 = vrot.slane %v149, %v153
      %v155 = vlaneseq
      %v156 = vshrl.u32 %v155, 7
      %v157 = vsub.s32 1, %v156
      %v158 = vrot.slane %v149, %v157
      %v161 = vadd.f32 %v145, %v154
      %v162 = vadd.f32 %v146, %v158
      %v163 = vadd.f32 %v147, %v154
      %v164 = vadd.f32 %v148, %v158
      %165 = vst [vmem:[#allocation8] sm:$0xff] %v161
      %166 = vst [vmem:[#allocation8 + $0x8] sm:$0xff] %v162
      %167 = vst [vmem:[#allocation8 + $0x10] sm:$0xff] %v163
      %168 = vst [vmem:[#allocation8 + $0x18] sm:$0xff] %v164
    $region29: #{tpu_custom_call.1} parent=1 // pred_fallthru
      _
    // Predicated region
    $region30: #{tpu_custom_call.1} parent=1 // pred_check
      _
    $region31: #{tpu_custom_call.1} parent=1 // pred_check_branch
      %170 = sbr.rel (0) target = $region33
    $region32: #{tpu_custom_call.1} parent=1 // pred_region
      %s172 = ssub.s32 512, 512
      %173 = vsyncadd [#allocation5], %s172
      %s174 = sshll.u32 [#allocation8], 4
      %s175 = int_to_ptr.vmem [resolvable:$true] %s174
      %180 = dma.vmem_to_hbm [thread:$0]  %s175, 512, %s3, [#allocation5], 256, 256, 16
    $region33: #{tpu_custom_call.1} parent=1 // pred_fallthru
      _
    // Predicated region
    $region34: #{tpu_custom_call.1} parent=1 // pred_check
      _
    $region35: #{tpu_custom_call.1} parent=1 // pred_check_branch
      %182 = sbr.rel (0) target = $region37
    $region36: #{tpu_custom_call.1} parent=1 // pred_region
      %183 = dma.done [#allocation5], 512
    $region37: #{tpu_custom_call.1} parent=1 // pred_fallthru
      _
    %184 = vsyncpa [#allocation4], 1
    %185 = vsyncpa [#allocation7], 1
    %186 = vsyncpa [#allocation5], 1

</llo_original>
